<compile_context>
chip_gen: v7x
topology: tpu7x:2x2x1
jax: 0.10.0
libtpu: 0.0.40
codegen_flags: <defaults>
</compile_context>

<pallas_src>
import numpy as np
import jax
import jax.numpy as jnp
from jax.experimental import pallas as pl
from jax.experimental.pallas import tpu as pltpu


def _round_up(a: int, b: int) -> int:
    return ((a + b - 1) // b) * b


def _pick_tile(dim: int, max_tile: int, align: int) -> int:
    """Largest tile <= max_tile, aligned to `align`, minimizing pad waste."""
    dim_p = _round_up(dim, align)
    if dim_p <= max_tile:
        return dim_p
    n_tiles = -(-dim_p // max_tile)
    return _round_up(-(-dim_p // n_tiles), align)


# ---------------------------------------------------------------------------
# Deterministic parameter setup (glue, plain numpy): reproduce pywt's 'morl'
# integrated wavelet and fold conv+diff+trim into a [F, T, T] weight tensor.
# ---------------------------------------------------------------------------
def default_widths(n: int = 5) -> np.ndarray:
    # Same formula as CWT.__init__
    return np.round((np.exp(np.linspace(0.0, 2.5, n)) - 1.0) * 30.0, 0).astype(int) + 1


def _morlet_int_psi(precision: int = 10):
    nx = 2 ** precision
    xs = np.linspace(-8.0, 8.0, nx)                    # pywt 'morl' support [-8, 8]
    psi = np.exp(-xs ** 2 / 2.0) * np.cos(5.0 * xs)    # Morlet wavelet
    step = xs[1] - xs[0]
    int_psi = np.cumsum(psi) * step                    # pywt.integrate_wavelet
    return int_psi, xs, step


def build_cwt_weight(widths, T: int, precision: int = 10) -> np.ndarray:
    """W[f, t, k] such that out[f, ..., t, ...] = sum_k W[f, t, k] * data[..., k, ...]."""
    int_psi, xs, step = _morlet_int_psi(precision)
    span = xs[-1] - xs[0]
    F = len(widths)
    W = np.zeros((F, T, T), dtype=np.float64)
    t_idx = np.arange(T)[:, None]
    k_idx = np.arange(T)[None, :]
    for fi, scale in enumerate(widths):
        scale = int(scale)
        j = (np.arange(scale * span + 1) / (scale * step)).astype(int)
        j = j[j < int_psi.size]
        filt = int_psi[j][::-1]                        # int_psi_scale, length L
        L = filt.size
        c = (L - 2) // 2                               # centered-trim offset floor((L-2)/2)

        def take(p):
            v = np.zeros(p.shape, dtype=np.float64)
            m = (p >= 0) & (p < L)
            v[m] = filt[p[m]]
            return v

        # out[t] = -sqrt(s) * (conv[t+c+1] - conv[t+c]); conv is full convolution
        p0 = t_idx + c - k_idx
        W[fi] = -np.sqrt(scale) * (take(p0 + 1) - take(p0))
    return W


# ---------------------------------------------------------------------------
# Pure-numpy reference replicating pywt.cwt(..., 'morl', axis=1) + permute.
# ---------------------------------------------------------------------------
def numpy_cwt_ref(x64: np.ndarray, widths) -> np.ndarray:
    int_psi, xs, step = _morlet_int_psi()
    N, T, C = x64.shape
    data = np.swapaxes(x64, 1, 2)                      # [N, C, T] (time last)
    out = np.empty((len(widths), N, T, C), dtype=np.float64)
    for fi, scale in enumerate(widths):
        scale = int(scale)
        j = (np.arange(scale * (xs[-1] - xs[0]) + 1) / (scale * step)).astype(int)
        j = j[j < int_psi.size]
        filt = int_psi[j][::-1]
        conv = np.apply_along_axis(lambda d: np.convolve(d, filt), -1, data)
        coef = -np.sqrt(scale) * np.diff(conv, axis=-1)
        d = (coef.shape[-1] - T) / 2.0
        coef = coef[..., int(np.floor(d)):-int(np.ceil(d))]
        out[fi] = np.swapaxes(coef, 1, 2)              # back to [N, T, C]
    return np.transpose(out, (1, 2, 3, 0))             # [N, T, C, F]


# ---------------------------------------------------------------------------
# Pallas kernel: tiled [F*T, T] @ [T, N*C] matmul with f32 VMEM accumulator.
# ---------------------------------------------------------------------------
def cwt_matmul_kernel(w_ref, x_ref, o_ref, acc_ref):
    # w_ref: [tm, tk], x_ref: [tk, tn], o_ref: [tm, tn], acc_ref: [tm, tn] f32
    @pl.when(pl.program_id(2) == 0)
    def _():
        acc_ref[...] = jnp.zeros_like(acc_ref)

    acc_ref[...] += jnp.dot(w_ref[...], x_ref[...],
                            preferred_element_type=jnp.float32)

    @pl.when(pl.program_id(2) == pl.num_programs(2) - 1)
    def _():
        o_ref[...] = acc_ref[...].astype(o_ref.dtype)


def cwt_forward(x: jnp.ndarray, W64: np.ndarray, *,
                compute_dtype=jnp.float32,
                tile_m: int = 256, tile_n: int = 512, tile_k: int = 256) -> jnp.ndarray:
    """x: [N, T, C] (or [T, C] unbatched) -> [N, T, C, F] (or [T, C, F])."""
    # TODO(synk): torch/pywt reference returns float64; TPU Pallas computes in float32.
    # TODO(synk): on v6e/v7x pass compute_dtype=jnp.bfloat16 (halves W HBM traffic,
    # ~2x MXU throughput); re-validate the tolerance — the largest-scale weights may
    # need to stay f32.
    batched = x.ndim == 3
    if not batched:
        x = x[None]
    N, T, C = x.shape
    F = W64.shape[0]
    M, K, NC = F * T, T, N * C

    # Tile selection: lane (minor) dims tn/tk must be multiples of 128; sublane
    # (second-minor) dim tm multiple of 8 (f32).  Pick tiles that minimize pad
    # waste, then pad the problem up to whole tiles.
    tm = _pick_tile(M, tile_m, 8)
    tn = _pick_tile(NC, tile_n, 128)
    tk = _pick_tile(K, tile_k, 128)
    Mp, Np, Kp = _round_up(M, tm), _round_up(NC, tn), _round_up(K, tk)

    # Stacked, zero-padded weights [Mp, Kp] built host-side (deterministic).
    Wst = np.zeros((Mp, Kp), dtype=np.float64)
    Wst[:M, :K] = W64.reshape(M, K)
    W = jnp.asarray(Wst, dtype=compute_dtype)

    # x [N,T,C] -> lane-dense [T, N*C], zero-padded to [Kp, Np].
    x2d = jnp.transpose(x.astype(compute_dtype), (1, 0, 2)).reshape(T, NC)
    x2d = jnp.pad(x2d, ((0, Kp - K), (0, Np - NC)))

    itemsize = jnp.dtype(compute_dtype).itemsize
    cost = pl.CostEstimate(
        flops=2 * Mp * Np * Kp,
        transcendentals=0,
        bytes_accessed=itemsize * (Mp * Kp + Kp * Np) + 4 * Mp * Np,
    )

    out2d = pl.pallas_call(
        cwt_matmul_kernel,
        out_shape=jax.ShapeDtypeStruct((Mp, Np), jnp.float32),
        grid_spec=pltpu.PrefetchScalarGridSpec(
            num_scalar_prefetch=0,
            grid=(Mp // tm, Np // tn, Kp // tk),       # (M, N, K) — reduction last
            in_specs=[
                pl.BlockSpec((tm, tk), lambda i, j, k: (i, k)),   # stacked weights
                pl.BlockSpec((tk, tn), lambda i, j, k: (k, j)),   # x2d (reused over M)
            ],
            out_specs=pl.BlockSpec((tm, tn), lambda i, j, k: (i, j)),
            scratch_shapes=[pltpu.VMEM((tm, tn), jnp.float32)],
        ),
        compiler_params=pltpu.CompilerParams(
            dimension_semantics=("parallel", "parallel", "arbitrary"),
        ),
        cost_estimate=cost,
    )(W, x2d)

    out = out2d[:M, :NC].reshape(F, T, N, C)
    out = jnp.transpose(out, (2, 1, 3, 0))             # [N, T, C, F]
    if not batched:
        out = out[0]
    return out


if __name__ == "__main__":
    N, T, C = 2, 16, 4
    widths = default_widths()                          # [1, 27, 76, 167, 336]
    F = len(widths)

    key = jax.random.PRNGKey(0)
    x = jax.random.normal(key, (N, T, C), dtype=jnp.float32)

    W64 = build_cwt_weight(widths, T)

    out = cwt_forward(x, W64)
    out = jax.block_until_ready(out)

    # --- correctness checks -------------------------------------------------
    x64 = np.asarray(x, dtype=np.float64)
    ref = numpy_cwt_ref(x64, widths)                   # pywt-equivalent reference
    ref_folded = np.einsum("ftk,nkc->ntcf", W64, x64)  # check weight folding is exact
    assert np.allclose(ref_folded, ref, rtol=1e-8, atol=1e-10), "weight folding mismatch"

    assert out.shape == (N, T, C, F), out.shape
    assert np.allclose(np.asarray(out), ref, rtol=2e-3, atol=2e-3), "kernel mismatch"

    print("KERNEL_OK")
</pallas_src>

<mosaic_0001>
module attributes {stable_mosaic.version = 11 : i64} {
  func.func @cwt_matmul_kernel(%arg0: i32, %arg1: i32, %arg2: i32, %arg3: memref<80x128xf32, #tpu.memory_space<vmem>>, %arg4: memref<128x128xf32, #tpu.memory_space<vmem>>, %arg5: memref<80x128xf32, #tpu.memory_space<vmem>>, %arg6: memref<80x128xf32, #tpu.memory_space<vmem>>) attributes {dimension_semantics = [#tpu.dimension_semantics<parallel>, #tpu.dimension_semantics<parallel>, #tpu.dimension_semantics<arbitrary>], iteration_bounds = array<i64: 1, 1, 1>, scalar_prefetch = 0 : i64, scratch_operands = 1 : i64, tpu.core_type = #tpu.core_type<tc>, window_params = [{transform_indices = @transform_0, window_bounds = array<i64: 80, 128>}, {transform_indices = @transform_1, window_bounds = array<i64: 128, 128>}, {transform_indices = @transform_2, window_bounds = array<i64: 80, 128>}]} {
    %c0_i32 = arith.constant 0 : i32
    %0 = arith.cmpi eq, %arg2, %c0_i32 : i32
    %1 = arith.extui %0 : i1 to i32
    %c0_i32_0 = arith.constant 0 : i32
    %2 = arith.cmpi ne, %1, %c0_i32_0 : i32
    scf.if %2 {
      %cst_10 = arith.constant 0.000000e+00 : f32
      %12 = vector.broadcast %cst_10 : f32 to vector<80x128xf32>
      %c0_11 = arith.constant 0 : index
      %c0_12 = arith.constant 0 : index
      %13 = vector.load %arg6[%c0_11, %c0_12] : memref<80x128xf32, #tpu.memory_space<vmem>>, vector<80x128xf32>
      tpu.vector_store %arg6[%c0_11, %c0_12], %12 {strides = array<i32>} : memref<80x128xf32, #tpu.memory_space<vmem>>, vector<80x128xf32>,
    } else {
    }
    %c0 = arith.constant 0 : index
    %c0_1 = arith.constant 0 : index
    %3 = vector.load %arg6[%c0, %c0_1] : memref<80x128xf32, #tpu.memory_space<vmem>>, vector<80x128xf32>
    %c0_2 = arith.constant 0 : index
    %c0_3 = arith.constant 0 : index
    %4 = vector.load %arg3[%c0_2, %c0_3] : memref<80x128xf32, #tpu.memory_space<vmem>>, vector<80x128xf32>
    %c0_4 = arith.constant 0 : index
    %c0_5 = arith.constant 0 : index
    %5 = vector.load %arg4[%c0_4, %c0_5] : memref<128x128xf32, #tpu.memory_space<vmem>>, vector<128x128xf32>
    %cst = arith.constant dense<0.000000e+00> : vector<80x128xf32>
    %6 = tpu.matmul %4, %5, %cst {dimension_numbers = #tpu.dot_dimension_numbers<[1], [0], [0], [1], [0, 0, 1, 1], [], []>} : vector<80x128xf32>, vector<128x128xf32>, vector<80x128xf32> -> vector<80x128xf32>
    %7 = arith.addf %3, %6 : vector<80x128xf32>
    %c0_6 = arith.constant 0 : index
    %c0_7 = arith.constant 0 : index
    %8 = vector.load %arg6[%c0_6, %c0_7] : memref<80x128xf32, #tpu.memory_space<vmem>>, vector<80x128xf32>
    tpu.vector_store %arg6[%c0_6, %c0_7], %7 {strides = array<i32>} : memref<80x128xf32, #tpu.memory_space<vmem>>, vector<80x128xf32>,
    %c0_i32_8 = arith.constant 0 : i32
    %9 = arith.cmpi eq, %arg2, %c0_i32_8 : i32
    %10 = arith.extui %9 : i1 to i32
    %c0_i32_9 = arith.constant 0 : i32
    %11 = arith.cmpi ne, %10, %c0_i32_9 : i32
    scf.if %11 {
      %c0_10 = arith.constant 0 : index
      %c0_11 = arith.constant 0 : index
      %12 = vector.load %arg6[%c0_10, %c0_11] : memref<80x128xf32, #tpu.memory_space<vmem>>, vector<80x128xf32>
      %c0_12 = arith.constant 0 : index
      %c0_13 = arith.constant 0 : index
      %13 = vector.load %arg5[%c0_12, %c0_13] : memref<80x128xf32, #tpu.memory_space<vmem>>, vector<80x128xf32>
      tpu.vector_store %arg5[%c0_12, %c0_13], %12 {strides = array<i32>} : memref<80x128xf32, #tpu.memory_space<vmem>>, vector<80x128xf32>,
    } else {
    }
    return
  }
  func.func @transform_0(%arg0: i32, %arg1: i32, %arg2: i32) -> (i32, i32) {
    %c0_i32 = arith.constant 0 : i32
    return %arg0, %arg2 : i32, i32
  }
  func.func @transform_1(%arg0: i32, %arg1: i32, %arg2: i32) -> (i32, i32) {
    %c0_i32 = arith.constant 0 : i32
    return %arg2, %arg1 : i32, i32
  }
  func.func @transform_2(%arg0: i32, %arg1: i32, %arg2: i32) -> (i32, i32) {
    %c0_i32 = arith.constant 0 : i32
    return %arg0, %arg1 : i32, i32
  }
}

</mosaic_0001>

<llo_original>
// kernel: tpu_custom_call.1
$region0: #{tpu_custom_call.1}
  #allocation0 [shape = 'u32[]', space=smem, size = 0x4, offset = 0x4, fixed_abs, tag = 'smem constant byte address 0x4 - core index']
  #allocation1 [shape = 'u32[144,128]{1,0:T(1,128)}', space=vmem, size = 0x12000, scoped, tag = 'internal scratch']
  #allocation2 [shape = 'f32[80,128]{1,0:T(8,128)}', space=vmem, size = 0xa000, scoped, tag = 'scratch operand']
  %s0 = inlined_call_operand.hbm [shape: f32[80,128], index: 0, kind: input, shape index: {}]
  %s1 = inlined_call_operand.hbm [shape: f32[128,128], index: 1, kind: input, shape index: {}]
  %s2 = inlined_call_operand.hbm [shape: f32[80,128], index: 2, kind: output, shape index: {}]
  %s3 = sld [smem:[#allocation0]]
  $region34: #{tpu_custom_call.1} parent=0
    _
  %s5 = ssub.s32 1, %s3
  %s6 = scalar_select 0, %s5, %s3
  $region1: #{tpu_custom_call.1} parent=0
    #allocation3 [shape = 'u8[40960]{0}', space=vmem, size = 0xa000, scoped, tag = 'input window, operand 0, single buffered']
    #allocation4 [shape = 's32[1]{0}', space=sflag, size = 0x4, scoped, tag = 'scoped memory for tpu_custom_call.1']
    #allocation5 [shape = 's32[1]{0}', space=sflag, size = 0x4, scoped, tag = 'scoped memory for tpu_custom_call.1']
    #allocation6 [shape = 'u8[65536]{0}', space=vmem, size = 0x10000, scoped, tag = 'input window, operand 1, single buffered']
    #allocation7 [shape = 's32[1]{0}', space=sflag, size = 0x4, scoped, tag = 'scoped memory for tpu_custom_call.1']
    #allocation8 [shape = 'u8[40960]{0}', space=vmem, size = 0xa000, scoped, tag = 'output window, operand 0, single buffered']
    %7 = vsyncpa [#allocation4], 0
    %8 = vsyncpa [#allocation7], 0
    %9 = vsyncpa [#allocation5], 0
    // Predicated region
    $region2: #{tpu_custom_call.1} parent=1 // pred_check
      _
    $region3: #{tpu_custom_call.1} parent=1 // pred_check_branch
      %11 = sbr.rel (0) target = $region5
    $region4: #{tpu_custom_call.1} parent=1 // pred_region
      %s13 = ssub.s32 1280, 1280
      %14 = vsyncadd [#allocation4], %s13
      %s15 = sshll.u32 [#allocation3], 4
      %s16 = int_to_ptr.vmem [resolvable:$true] %s15
      %21 = dma.hbm_to_vmem [thread:$0]  %s0, 1280, %s16, [#allocation4], 128, 128, 8
    $region5: #{tpu_custom_call.1} parent=1 // pred_fallthru
      _
    // Predicated region
    $region6: #{tpu_custom_call.1} parent=1 // pred_check
      _
    $region7: #{tpu_custom_call.1} parent=1 // pred_check_branch
      %23 = sbr.rel (0) target = $region9
    $region8: #{tpu_custom_call.1} parent=1 // pred_region
      %s25 = ssub.s32 2048, 2048
      %26 = vsyncadd [#allocation7], %s25
      %s27 = sshll.u32 [#allocation6], 4
      %s28 = int_to_ptr.vmem [resolvable:$true] %s27
      %33 = dma.hbm_to_vmem [thread:$0]  %s1, 2048, %s28, [#allocation7], 128, 128, 8
    $region9: #{tpu_custom_call.1} parent=1 // pred_fallthru
      _
    // Predicated region
    $region10: #{tpu_custom_call.1} parent=1 // pred_check
      _
    $region11: #{tpu_custom_call.1} parent=1 // pred_check_branch
      %35 = sbr.rel (0) target = $region13
    $region12: #{tpu_custom_call.1} parent=1 // pred_region
      %36 = dma.done [#allocation4], 1280
    $region13: #{tpu_custom_call.1} parent=1 // pred_fallthru
      _
    // Predicated region
    $region14: #{tpu_custom_call.1} parent=1 // pred_check
      _
    $region15: #{tpu_custom_call.1} parent=1 // pred_check_branch
      %38 = sbr.rel (0) target = $region17
    $region16: #{tpu_custom_call.1} parent=1 // pred_region
      %39 = dma.done [#allocation7], 2048
    $region17: #{tpu_custom_call.1} parent=1 // pred_fallthru
      _
    %p40 = scmp.eq.s32.totalorder 0, 0
    // Predicated region
    $region18: #{tpu_custom_call.1} parent=1 // pred_check
      %p41 = pneg %p40
    $region19: #{tpu_custom_call.1} parent=1 // pred_check_branch
      %43 = sbr.rel (%p41) target = $region21
    $region20: #{tpu_custom_call.1} parent=1 // pred_region
      %44 = vst [vmem:[#allocation2] sm:$0xff] 0.0
      %45 = vst [vmem:[#allocation2 + $0x8] sm:$0xff] 0.0
      %46 = vst [vmem:[#allocation2 + $0x10] sm:$0xff] 0.0
      %47 = vst [vmem:[#allocation2 + $0x18] sm:$0xff] 0.0
      %48 = vst [vmem:[#allocation2 + $0x20] sm:$0xff] 0.0
      %49 = vst [vmem:[#allocation2 + $0x28] sm:$0xff] 0.0
      %50 = vst [vmem:[#allocation2 + $0x30] sm:$0xff] 0.0
      %51 = vst [vmem:[#allocation2 + $0x38] sm:$0xff] 0.0
      %52 = vst [vmem:[#allocation2 + $0x40] sm:$0xff] 0.0
      %53 = vst [vmem:[#allocation2 + $0x48] sm:$0xff] 0.0
    $region21: #{tpu_custom_call.1} parent=1 // pred_fallthru
      _
    %v54 = vld [vmem:[#allocation2] sm:$0xff]
    %v55 = vld [vmem:[#allocation2 + $0x8] sm:$0xff]
    %v56 = vld [vmem:[#allocation2 + $0x10] sm:$0xff]
    %v57 = vld [vmem:[#allocation2 + $0x18] sm:$0xff]
    %v58 = vld [vmem:[#allocation2 + $0x20] sm:$0xff]
    %v59 = vld [vmem:[#allocation2 + $0x28] sm:$0xff]
    %v60 = vld [vmem:[#allocation2 + $0x30] sm:$0xff]
    %v61 = vld [vmem:[#allocation2 + $0x38] sm:$0xff]
    %v62 = vld [vmem:[#allocation2 + $0x40] sm:$0xff]
    %v63 = vld [vmem:[#allocation2 + $0x48] sm:$0xff]
    %v64 = vld [vmem:[#allocation3] sm:$0xff]
    %v65 = vld [vmem:[#allocation3 + $0x8] sm:$0xff]
    %v66 = vld [vmem:[#allocation3 + $0x10] sm:$0xff]
    %v67 = vld [vmem:[#allocation3 + $0x18] sm:$0xff]
    %v68 = vld [vmem:[#allocation3 + $0x20] sm:$0xff]
    %v69 = vld [vmem:[#allocation3 + $0x28] sm:$0xff]
    %v70 = vld [vmem:[#allocation3 + $0x30] sm:$0xff]
    %v71 = vld [vmem:[#allocation3 + $0x38] sm:$0xff]
    %v72 = vld [vmem:[#allocation3 + $0x40] sm:$0xff]
    %v73 = vld [vmem:[#allocation3 + $0x48] sm:$0xff]
    %v74 = vld [vmem:[#allocation6] sm:$0xff]
    %v75 = vld [vmem:[#allocation6 + $0x8] sm:$0xff]
    %v76 = vld [vmem:[#allocation6 + $0x10] sm:$0xff]
    %v77 = vld [vmem:[#allocation6 + $0x18] sm:$0xff]
    %v78 = vld [vmem:[#allocation6 + $0x20] sm:$0xff]
    %v79 = vld [vmem:[#allocation6 + $0x28] sm:$0xff]
    %v80 = vld [vmem:[#allocation6 + $0x30] sm:$0xff]
    %v81 = vld [vmem:[#allocation6 + $0x38] sm:$0xff]
    %v82 = vld [vmem:[#allocation6 + $0x40] sm:$0xff]
    %v83 = vld [vmem:[#allocation6 + $0x48] sm:$0xff]
    %v84 = vld [vmem:[#allocation6 + $0x50] sm:$0xff]
    %v85 = vld [vmem:[#allocation6 + $0x58] sm:$0xff]
    %v86 = vld [vmem:[#allocation6 + $0x60] sm:$0xff]
    %v87 = vld [vmem:[#allocation6 + $0x68] sm:$0xff]
    %v88 = vld [vmem:[#allocation6 + $0x70] sm:$0xff]
    %v89 = vld [vmem:[#allocation6 + $0x78] sm:$0xff]
    %90 = vmatprep.subr.mxu0 0.0
    %91 = vmatpush1.msra.mxu0 %v74
    %92 = vmatprep.subr.mxu0 0.0
    %93 = vmatpush1.msra.mxu0 %v75
    %94 = vmatprep.subr.mxu0 0.0
    %95 = vmatpush1.msra.mxu0 %v76
    %96 = vmatprep.subr.mxu0 0.0
    %97 = vmatpush1.msra.mxu0 %v77
    %98 = vmatprep.subr.mxu0 0.0
    %99 = vmatpush1.msra.mxu0 %v78
    %100 = vmatprep.subr.mxu0 0.0
    %101 = vmatpush1.msra.mxu0 %v79
    %102 = vmatprep.subr.mxu0 0.0
    %103 = vmatpush1.msra.mxu0 %v80
    %104 = vmatprep.subr.mxu0 0.0
    %105 = vmatpush1.msra.mxu0 %v81
    %106 = vmatprep.subr.mxu0 0.0
    %107 = vmatpush1.msra.mxu0 %v82
    %108 = vmatprep.subr.mxu0 0.0
    %109 = vmatpush1.msra.mxu0 %v83
    %110 = vmatprep.subr.mxu0 0.0
    %111 = vmatpush1.msra.mxu0 %v84
    %112 = vmatprep.subr.mxu0 0.0
    %113 = vmatpush1.msra.mxu0 %v85
    %114 = vmatprep.subr.mxu0 0.0
    %115 = vmatpush1.msra.mxu0 %v86
    %116 = vmatprep.subr.mxu0 0.0
    %117 = vmatpush1.msra.mxu0 %v87
    %118 = vmatprep.subr.mxu0 0.0
    %119 = vmatpush1.msra.mxu0 %v88
    %120 = vmatprep.subr.mxu0 0.0
    %121 = vmatpush1.msra.mxu0 %v89
    %122 = vmatprep.subr.mxu0 0.0
    %123 = vmatpush1.msra.mxu0 0.0
    %124 = vmatprep.subr.mxu0 0.0
    %125 = vmatpush1.msra.mxu0 0.0
    %126 = vmatprep.subr.mxu0 0.0
    %127 = vmatpush1.msra.mxu0 0.0
    %128 = vmatprep.subr.mxu0 0.0
    %129 = vmatpush1.msra.mxu0 0.0
    %130 = vmatprep.subr.mxu0 0.0
    %131 = vmatpush1.msra.mxu0 0.0
    %132 = vmatprep.subr.mxu0 0.0
    %133 = vmatpush1.msra.mxu0 0.0
    %134 = vmatprep.subr.mxu0 0.0
    %135 = vmatpush1.msra.mxu0 0.0
    %136 = vmatprep.subr.mxu0 0.0
    %137 = vmatpush1.msra.mxu0 0.0
    %138 = vmatprep.subr.mxu0 0.0
    %139 = vmatpush1.msra.mxu0 0.0
    %140 = vmatprep.subr.mxu0 0.0
    %141 = vmatpush1.msra.mxu0 0.0
    %142 = vmatprep.subr.mxu0 0.0
    %143 = vmatpush1.msra.mxu0 0.0
    %144 = vmatprep.subr.mxu0 0.0
    %145 = vmatpush1.msra.mxu0 0.0
    %146 = vmatprep.subr.mxu0 0.0
    %147 = vmatpush1.msra.mxu0 0.0
    %148 = vmatprep.subr.mxu0 0.0
    %149 = vmatpush1.msra.mxu0 0.0
    %150 = vmatprep.subr.mxu0 0.0
    %151 = vmatpush1.msra.mxu0 0.0
    %152 = vmatprep.subr.mxu0 0.0
    %153 = vmatpush1.msra.mxu0 0.0
    %154 = vmatprep.mubr.f32.mxu0 0.0
    %155 = vmatmul.mubr.f32.gmra.mrb[0].mxu0 %v64
    %v156 = vpop.f32.mrb[0].mxu0
    %v157 = vadd.f32 0.0, %v156
    %v158 = vpop.f32.mrb[0].mxu0
    %159 = vmatprep.mubr.f32.mxu0 0.0
    %160 = vmatmul.mubr.f32.gmra.mrb[0].mxu0 %v65
    %v161 = vpop.f32.mrb[0].mxu0
    %v162 = vadd.f32 0.0, %v161
    %v163 = vpop.f32.mrb[0].mxu0
    %164 = vmatprep.mubr.f32.mxu0 0.0
    %165 = vmatmul.mubr.f32.gmra.mrb[0].mxu0 %v66
    %v166 = vpop.f32.mrb[0].mxu0
    %v167 = vadd.f32 0.0, %v166
    %v168 = vpop.f32.mrb[0].mxu0
    %169 = vmatprep.mubr.f32.mxu0 0.0
    %170 = vmatmul.mubr.f32.gmra.mrb[0].mxu0 %v67
    %v171 = vpop.f32.mrb[0].mxu0
    %v172 = vadd.f32 0.0, %v171
    %v173 = vpop.f32.mrb[0].mxu0
    %174 = vmatprep.mubr.f32.mxu0 0.0
    %175 = vmatmul.mubr.f32.gmra.mrb[0].mxu0 %v68
    %v176 = vpop.f32.mrb[0].mxu0
    %v177 = vadd.f32 0.0, %v176
    %v178 = vpop.f32.mrb[0].mxu0
    %179 = vmatprep.mubr.f32.mxu0 0.0
    %180 = vmatmul.mubr.f32.gmra.mrb[0].mxu0 %v69
    %v181 = vpop.f32.mrb[0].mxu0
    %v182 = vadd.f32 0.0, %v181
    %v183 = vpop.f32.mrb[0].mxu0
    %184 = vmatprep.mubr.f32.mxu0 0.0
    %185 = vmatmul.mubr.f32.gmra.mrb[0].mxu0 %v70
    %v186 = vpop.f32.mrb[0].mxu0
    %v187 = vadd.f32 0.0, %v186
    %v188 = vpop.f32.mrb[0].mxu0
    %189 = vmatprep.mubr.f32.mxu0 0.0
    %190 = vmatmul.mubr.f32.gmra.mrb[0].mxu0 %v71
    %v191 = vpop.f32.mrb[0].mxu0
    %v192 = vadd.f32 0.0, %v191
    %v193 = vpop.f32.mrb[0].mxu0
    %194 = vmatprep.mubr.f32.mxu0 0.0
    %195 = vmatmul.mubr.f32.gmra.mrb[0].mxu0 %v72
    %v196 = vpop.f32.mrb[0].mxu0
    %v197 = vadd.f32 0.0, %v196
    %v198 = vpop.f32.mrb[0].mxu0
    %199 = vmatprep.mubr.f32.mxu0 0.0
    %200 = vmatmul.mubr.f32.gmra.mrb[0].mxu0 %v73
    %v201 = vpop.f32.mrb[0].mxu0
    %v202 = vadd.f32 0.0, %v201
    %v203 = vpop.f32.mrb[0].mxu0
    %204 = vdwg.mxu0
    %v205 = vadd.f32 %v54, %v157
    %v206 = vadd.f32 %v55, %v162
    %v207 = vadd.f32 %v56, %v167
    %v208 = vadd.f32 %v57, %v172
    %v209 = vadd.f32 %v58, %v177
    %v210 = vadd.f32 %v59, %v182
    %v211 = vadd.f32 %v60, %v187
    %v212 = vadd.f32 %v61, %v192
    %v213 = vadd.f32 %v62, %v197
    %v214 = vadd.f32 %v63, %v202
    %215 = vst [vmem:[#allocation2] sm:$0xff] %v205
    %216 = vst [vmem:[#allocation2 + $0x8] sm:$0xff] %v206
    %217 = vst [vmem:[#allocation2 + $0x10] sm:$0xff] %v207
    %218 = vst [vmem:[#allocation2 + $0x18] sm:$0xff] %v208
    %219 = vst [vmem:[#allocation2 + $0x20] sm:$0xff] %v209
    %220 = vst [vmem:[#allocation2 + $0x28] sm:$0xff] %v210
    %221 = vst [vmem:[#allocation2 + $0x30] sm:$0xff] %v211
    %222 = vst [vmem:[#allocation2 + $0x38] sm:$0xff] %v212
    %223 = vst [vmem:[#allocation2 + $0x40] sm:$0xff] %v213
    %224 = vst [vmem:[#allocation2 + $0x48] sm:$0xff] %v214
    // Predicated region
    $region22: #{tpu_custom_call.1} parent=1 // pred_check
      %p225 = pneg %p40
    $region23: #{tpu_custom_call.1} parent=1 // pred_check_branch
      %227 = sbr.rel (%p225) target = $region25
    $region24: #{tpu_custom_call.1} parent=1 // pred_region
      %v228 = vld [vmem:[#allocation2] sm:$0xff]
      %v229 = vld [vmem:[#allocation2 + $0x8] sm:$0xff]
      %v230 = vld [vmem:[#allocation2 + $0x10] sm:$0xff]
      %v231 = vld [vmem:[#allocation2 + $0x18] sm:$0xff]
      %v232 = vld [vmem:[#allocation2 + $0x20] sm:$0xff]
      %v233 = vld [vmem:[#allocation2 + $0x28] sm:$0xff]
      %v234 = vld [vmem:[#allocation2 + $0x30] sm:$0xff]
      %v235 = vld [vmem:[#allocation2 + $0x38] sm:$0xff]
      %v236 = vld [vmem:[#allocation2 + $0x40] sm:$0xff]
      %v237 = vld [vmem:[#allocation2 + $0x48] sm:$0xff]
      %238 = vst [vmem:[#allocation8] sm:$0xff] %v228
      %239 = vst [vmem:[#allocation8 + $0x8] sm:$0xff] %v229
      %240 = vst [vmem:[#allocation8 + $0x10] sm:$0xff] %v230
      %241 = vst [vmem:[#allocation8 + $0x18] sm:$0xff] %v231
      %242 = vst [vmem:[#allocation8 + $0x20] sm:$0xff] %v232
      %243 = vst [vmem:[#allocation8 + $0x28] sm:$0xff] %v233
      %244 = vst [vmem:[#allocation8 + $0x30] sm:$0xff] %v234
      %245 = vst [vmem:[#allocation8 + $0x38] sm:$0xff] %v235
      %246 = vst [vmem:[#allocation8 + $0x40] sm:$0xff] %v236
      %247 = vst [vmem:[#allocation8 + $0x48] sm:$0xff] %v237
    $region25: #{tpu_custom_call.1} parent=1 // pred_fallthru
      _
    // Predicated region
    $region26: #{tpu_custom_call.1} parent=1 // pred_check
      _
    $region27: #{tpu_custom_call.1} parent=1 // pred_check_branch
      %249 = sbr.rel (0) target = $region29
    $region28: #{tpu_custom_call.1} parent=1 // pred_region
      %s251 = ssub.s32 1280, 1280
      %252 = vsyncadd [#allocation5], %s251
      %s253 = sshll.u32 [#allocation8], 4
      %s254 = int_to_ptr.vmem [resolvable:$true] %s253
      %259 = dma.vmem_to_hbm [thread:$0]  %s254, 1280, %s2, [#allocation5], 128, 128, 8
    $region29: #{tpu_custom_call.1} parent=1 // pred_fallthru
      _
    // Predicated region
    $region30: #{tpu_custom_call.1} parent=1 // pred_check
      _
    $region31: #{tpu_custom_call.1} parent=1 // pred_check_branch
      %261 = sbr.rel (0) target = $region33
    $region32: #{tpu_custom_call.1} parent=1 // pred_region
      %262 = dma.done [#allocation5], 1280
    $region33: #{tpu_custom_call.1} parent=1 // pred_fallthru
      _
    %263 = vsyncpa [#allocation4], 1
    %264 = vsyncpa [#allocation7], 1
    %265 = vsyncpa [#allocation5], 1

</llo_original>
